<compile_context>
chip_gen: v5e
topology: v5e:2x2
jax: 0.10.0
libtpu: 0.0.40
codegen_flags: <defaults>
</compile_context>

<pallas_src>
import math

import jax
import jax.numpy as jnp
from jax.experimental import pallas as pl
from jax.experimental.pallas import tpu as pltpu

# ----------------------------- configuration -------------------------------
B = 2        # batch
S = 8        # sequence length
D = 32       # d_model (== EncoderLayer.size)
H = 4        # attention heads
DK = D // H  # per-head dim
DFF = 64     # feed-forward hidden dim
EPS = 1e-5   # torch.nn.LayerNorm default eps
BS = B * S

# rows of the packed small-parameter slab (8 rows x 128 lanes, fp32)
ROW_BQKV, ROW_BO, ROW_B1, ROW_B2 = 0, 1, 2, 3
ROW_LN1G, ROW_LN1B, ROW_LN2G, ROW_LN2B = 4, 5, 6, 7
VEC_LANES = 128


# ------------------------------ Pallas kernel ------------------------------
def encoder_layer_kernel(x_ref, wqkv_ref, wo_ref, w1_ref, w2_ref, vecs_ref,
                         out_ref):
    x = x_ref[...]            # (BS, D)
    vecs = vecs_ref[...]      # (8, 128) packed biases / LN params

    bqkv = vecs[ROW_BQKV:ROW_BQKV + 1, :3 * D]   # (1, 3D)  (q-part pre-scaled)
    bo   = vecs[ROW_BO:ROW_BO + 1, :D]
    b1   = vecs[ROW_B1:ROW_B1 + 1, :DFF]
    b2   = vecs[ROW_B2:ROW_B2 + 1, :D]
    ln1g = vecs[ROW_LN1G:ROW_LN1G + 1, :D]
    ln1b = vecs[ROW_LN1B:ROW_LN1B + 1, :D]
    ln2g = vecs[ROW_LN2G:ROW_LN2G + 1, :D]
    ln2b = vecs[ROW_LN2B:ROW_LN2B + 1, :D]

    def layer_norm(v, g, b):
        mu = jnp.mean(v, axis=-1, keepdims=True)
        var = jnp.mean((v - mu) * (v - mu), axis=-1, keepdims=True)
        return (v - mu) * jax.lax.rsqrt(var + EPS) * g + b

    # ---------------- sublayer 0: x + self_attn(LN1(x)) ----------------
    y = layer_norm(x, ln1g, ln1b)                                        # (BS, D)
    qkv = jnp.dot(y, wqkv_ref[...],
                  preferred_element_type=jnp.float32) + bqkv             # (BS, 3D)

    # Static H=4 loop; each head is batched over B via 3-D einsums.  The output
    # projection is folded per head so no cross-head concat is ever built.
    attn = None
    for h in range(H):
        qh = qkv[:, h * DK:(h + 1) * DK].reshape(B, S, DK)               # scale folded in
        kh = qkv[:, D + h * DK:D + (h + 1) * DK].reshape(B, S, DK)
        vh = qkv[:, 2 * D + h * DK:2 * D + (h + 1) * DK].reshape(B, S, DK)

        sc = jnp.einsum("bqd,bkd->bqk", qh, kh,
                        preferred_element_type=jnp.float32)              # (B,S,S)
        sc = sc - jnp.max(sc, axis=-1, keepdims=True)
        e = jnp.exp(sc)
        p = e * pl.reciprocal(jnp.sum(e, axis=-1, keepdims=True), approx=True)
        ctx = jnp.einsum("bqk,bkd->bqd", p, vh,
                         preferred_element_type=jnp.float32)             # (B,S,DK)

        part = jnp.dot(ctx.reshape(BS, DK), wo_ref[h * DK:(h + 1) * DK, :],
                       preferred_element_type=jnp.float32)               # (BS, D)
        attn = part if attn is None else attn + part

    x1 = x + attn + bo            # residual (dropout == identity in eval)

    # ---------------- sublayer 1: x + ffn(LN2(x)) ----------------
    y2 = layer_norm(x1, ln2g, ln2b)
    hdn = jnp.dot(y2, w1_ref[...], preferred_element_type=jnp.float32) + b1
    hdn = jnp.maximum(hdn, 0.0)                                          # ReLU
    ff = jnp.dot(hdn, w2_ref[...], preferred_element_type=jnp.float32) + b2

    out_ref[...] = x1 + ff


# ------------------------------ wrapper -------------------------------------
@jax.jit
def encoder_layer(x, params):
    (wq, bq, wk, bk, wv, bv, wo, bo,
     ln1g, ln1b, ln2g, ln2b, w1, b1, w2, b2) = params

    # Fold 1/sqrt(d_k) into the (static) Q projection, fuse QKV weights/biases.
    scale = 1.0 / math.sqrt(DK)
    wqkv = jnp.concatenate([wq * scale, wk, wv], axis=1)   # (D, 3D)
    bqkv = jnp.concatenate([bq * scale, bk, bv], axis=1)   # (1, 3D)

    # Pack all tiny vector params into one (8, 128) slab -> single DMA.
    def row(v):
        return jnp.pad(v, ((0, 0), (0, VEC_LANES - v.shape[1])))

    vecs = jnp.concatenate([
        row(bqkv),                                          # row 0
        row(bo), row(b1), row(b2),                          # rows 1-3
        row(ln1g), row(ln1b), row(ln2g), row(ln2b),         # rows 4-7
    ], axis=0)                                              # (8, 128)

    x2d = x.reshape(BS, D)                                  # contiguous, free

    vmem = pl.BlockSpec(memory_space=pltpu.MemorySpace.VMEM)
    out = pl.pallas_call(
        encoder_layer_kernel,
        out_shape=jax.ShapeDtypeStruct((BS, D), jnp.float32),
        in_specs=[vmem] * 6,
        out_specs=vmem,
    )(x2d, wqkv, wo, w1, w2, vecs)

    return out.reshape(B, S, D)


# ------------------------- pure-JAX reference --------------------------------
def encoder_layer_ref(x, params):
    (wq, bq, wk, bk, wv, bv, wo, bo,
     ln1g, ln1b, ln2g, ln2b, w1, b1, w2, b2) = params

    def ln(v, g, b):
        mu = jnp.mean(v, axis=-1, keepdims=True)
        var = jnp.mean((v - mu) ** 2, axis=-1, keepdims=True)
        return (v - mu) / jnp.sqrt(var + EPS) * g + b

    y = ln(x, ln1g, ln1b)
    q = y @ wq + bq
    k = y @ wk + bk
    v = y @ wv + bv
    qh = q.reshape(B, S, H, DK).transpose(0, 2, 1, 3)
    kh = k.reshape(B, S, H, DK).transpose(0, 2, 1, 3)
    vh = v.reshape(B, S, H, DK).transpose(0, 2, 1, 3)
    sc = jnp.einsum("bhqd,bhkd->bhqk", qh, kh) / math.sqrt(DK)
    p = jax.nn.softmax(sc, axis=-1)
    ctx = jnp.einsum("bhqk,bhkd->bhqd", p, vh).transpose(0, 2, 1, 3).reshape(B, S, D)
    x1 = x + (ctx @ wo + bo)

    y2 = ln(x1, ln2g, ln2b)
    return x1 + (jnp.maximum(y2 @ w1 + b1, 0.0) @ w2 + b2)


# ------------------------------- main ----------------------------------------
def make_params(key):
    ks = jax.random.split(key, 6)

    def w(k, shape):
        return jax.random.normal(k, shape, dtype=jnp.float32) * 0.02

    wq = w(ks[0], (D, D)); wk = w(ks[1], (D, D))
    wv = w(ks[2], (D, D)); wo = w(ks[3], (D, D))
    w1 = w(ks[4], (D, DFF)); w2 = w(ks[5], (DFF, D))
    zD = jnp.zeros((1, D), jnp.float32)
    zF = jnp.zeros((1, DFF), jnp.float32)
    oD = jnp.ones((1, D), jnp.float32)
    # (wq, bq, wk, bk, wv, bv, wo, bo, ln1g, ln1b, ln2g, ln2b, w1, b1, w2, b2)
    return (wq, zD, wk, zD, wv, zD, wo, zD,
            oD, zD, oD, zD, w1, zF, w2, zD)


if __name__ == "__main__":
    key = jax.random.PRNGKey(0)
    kx, kp = jax.random.split(key)
    x = jax.random.normal(kx, (B, S, D), dtype=jnp.float32)
    params = make_params(kp)

    out = jax.block_until_ready(encoder_layer(x, params))
    ref = encoder_layer_ref(x, params)

    assert out.shape == (B, S, D)
    assert jnp.allclose(out, ref, rtol=2e-2, atol=2e-2), "mismatch vs reference"

    print("KERNEL_OK")
</pallas_src>

<mosaic_0001>
module attributes {stable_mosaic.version = 11 : i64} {
  func.func @encoder_layer_kernel(%arg0: memref<16x32xf32, #tpu.memory_space<vmem>>, %arg1: memref<32x96xf32, #tpu.memory_space<vmem>>, %arg2: memref<32x32xf32, #tpu.memory_space<vmem>>, %arg3: memref<32x64xf32, #tpu.memory_space<vmem>>, %arg4: memref<64x32xf32, #tpu.memory_space<vmem>>, %arg5: memref<8x128xf32, #tpu.memory_space<vmem>>, %arg6: memref<16x32xf32, #tpu.memory_space<vmem>>) attributes {dimension_semantics = [], scalar_prefetch = 0 : i64, scratch_operands = 0 : i64, tpu.core_type = #tpu.core_type<tc>} {
    %c0 = arith.constant 0 : index
    %c0_0 = arith.constant 0 : index
    %0 = vector.load %arg0[%c0, %c0_0] : memref<16x32xf32, #tpu.memory_space<vmem>>, vector<16x32xf32>
    %c0_1 = arith.constant 0 : index
    %c0_2 = arith.constant 0 : index
    %1 = vector.load %arg5[%c0_1, %c0_2] : memref<8x128xf32, #tpu.memory_space<vmem>>, vector<8x128xf32>
    %2 = vector.extract_strided_slice %1 {offsets = [0, 0], sizes = [1, 96], strides = [1, 1]} : vector<8x128xf32> to vector<1x96xf32>
    %3 = vector.extract_strided_slice %1 {offsets = [1, 0], sizes = [1, 32], strides = [1, 1]} : vector<8x128xf32> to vector<1x32xf32>
    %4 = vector.extract_strided_slice %1 {offsets = [2, 0], sizes = [1, 64], strides = [1, 1]} : vector<8x128xf32> to vector<1x64xf32>
    %5 = vector.extract_strided_slice %1 {offsets = [3, 0], sizes = [1, 32], strides = [1, 1]} : vector<8x128xf32> to vector<1x32xf32>
    %6 = vector.extract_strided_slice %1 {offsets = [4, 0], sizes = [1, 32], strides = [1, 1]} : vector<8x128xf32> to vector<1x32xf32>
    %7 = vector.extract_strided_slice %1 {offsets = [5, 0], sizes = [1, 32], strides = [1, 1]} : vector<8x128xf32> to vector<1x32xf32>
    %8 = vector.extract_strided_slice %1 {offsets = [6, 0], sizes = [1, 32], strides = [1, 1]} : vector<8x128xf32> to vector<1x32xf32>
    %9 = vector.extract_strided_slice %1 {offsets = [7, 0], sizes = [1, 32], strides = [1, 1]} : vector<8x128xf32> to vector<1x32xf32>
    %cst = arith.constant dense<0.000000e+00> : vector<16xf32>
    %10 = vector.multi_reduction <add>, %0, %cst [1] : vector<16x32xf32> to vector<16xf32>
    %11 = vector.shape_cast %10 : vector<16xf32> to vector<16x1xf32>
    %cst_3 = arith.constant 3.200000e+01 : f32
    %12 = vector.broadcast %cst_3 : f32 to vector<16x1xf32>
    %13 = arith.divf %11, %12 : vector<16x1xf32>
    %14 = vector.broadcast %13 : vector<16x1xf32> to vector<16x32xf32>
    %15 = arith.subf %0, %14 : vector<16x32xf32>
    %16 = vector.broadcast %13 : vector<16x1xf32> to vector<16x32xf32>
    %17 = arith.subf %0, %16 : vector<16x32xf32>
    %18 = arith.mulf %15, %17 : vector<16x32xf32>
    %cst_4 = arith.constant dense<0.000000e+00> : vector<16xf32>
    %19 = vector.multi_reduction <add>, %18, %cst_4 [1] : vector<16x32xf32> to vector<16xf32>
    %20 = vector.shape_cast %19 : vector<16xf32> to vector<16x1xf32>
    %cst_5 = arith.constant 3.200000e+01 : f32
    %21 = vector.broadcast %cst_5 : f32 to vector<16x1xf32>
    %22 = arith.divf %20, %21 : vector<16x1xf32>
    %23 = vector.broadcast %13 : vector<16x1xf32> to vector<16x32xf32>
    %24 = arith.subf %0, %23 : vector<16x32xf32>
    %cst_6 = arith.constant 9.99999974E-6 : f32
    %25 = vector.broadcast %cst_6 : f32 to vector<16x1xf32>
    %26 = arith.addf %22, %25 : vector<16x1xf32>
    %27 = math.rsqrt %26 : vector<16x1xf32>
    %28 = vector.broadcast %27 : vector<16x1xf32> to vector<16x32xf32>
    %29 = arith.mulf %24, %28 : vector<16x32xf32>
    %30 = vector.broadcast %6 : vector<1x32xf32> to vector<16x32xf32>
    %31 = arith.mulf %29, %30 : vector<16x32xf32>
    %32 = vector.broadcast %7 : vector<1x32xf32> to vector<16x32xf32>
    %33 = arith.addf %31, %32 : vector<16x32xf32>
    %c0_7 = arith.constant 0 : index
    %c0_8 = arith.constant 0 : index
    %34 = vector.load %arg1[%c0_7, %c0_8] : memref<32x96xf32, #tpu.memory_space<vmem>>, vector<32x96xf32>
    %cst_9 = arith.constant dense<0.000000e+00> : vector<16x96xf32>
    %35 = tpu.matmul %33, %34, %cst_9 {dimension_numbers = #tpu.dot_dimension_numbers<[1], [0], [0], [1], [0, 0, 1, 1], [], []>} : vector<16x32xf32>, vector<32x96xf32>, vector<16x96xf32> -> vector<16x96xf32>
    %36 = vector.broadcast %2 : vector<1x96xf32> to vector<16x96xf32>
    %37 = arith.addf %35, %36 : vector<16x96xf32>
    %38 = vector.extract_strided_slice %37 {offsets = [0, 0], sizes = [16, 8], strides = [1, 1]} : vector<16x96xf32> to vector<16x8xf32>
    %39 = vector.shape_cast %38 : vector<16x8xf32> to vector<2x8x8xf32>
    %40 = vector.extract_strided_slice %37 {offsets = [0, 32], sizes = [16, 8], strides = [1, 1]} : vector<16x96xf32> to vector<16x8xf32>
    %41 = vector.shape_cast %40 : vector<16x8xf32> to vector<2x8x8xf32>
    %42 = vector.extract_strided_slice %37 {offsets = [0, 64], sizes = [16, 8], strides = [1, 1]} : vector<16x96xf32> to vector<16x8xf32>
    %43 = vector.shape_cast %42 : vector<16x8xf32> to vector<2x8x8xf32>
    "tpu.trace_start"() <{level = 10 : i32, message = "bqd,bkd->bqk"}> : () -> ()
    %cst_10 = arith.constant dense<0.000000e+00> : vector<2x8x8xf32>
    %44 = tpu.matmul %39, %41, %cst_10 {dimension_numbers = #tpu.dot_dimension_numbers<[2], [2], [1], [1], [0, 0, 0, 1, 1, 1], [0], [0]>} : vector<2x8x8xf32>, vector<2x8x8xf32>, vector<2x8x8xf32> -> vector<2x8x8xf32>
    "tpu.trace_stop"() : () -> ()
    %cst_11 = arith.constant dense<0xFF800000> : vector<2x8xf32>
    %45 = vector.multi_reduction <maximumf>, %44, %cst_11 [2] : vector<2x8x8xf32> to vector<2x8xf32>
    %46 = vector.shape_cast %45 : vector<2x8xf32> to vector<2x8x1xf32>
    %47 = vector.broadcast %46 : vector<2x8x1xf32> to vector<2x8x8xf32>
    %48 = arith.subf %44, %47 : vector<2x8x8xf32>
    %49 = math.exp %48 : vector<2x8x8xf32>
    %cst_12 = arith.constant dense<0.000000e+00> : vector<2x8xf32>
    %50 = vector.multi_reduction <add>, %49, %cst_12 [2] : vector<2x8x8xf32> to vector<2x8xf32>
    %51 = vector.shape_cast %50 : vector<2x8xf32> to vector<2x8x1xf32>
    %52 = tpu.reciprocal %51 {approx = true} : vector<2x8x1xf32> -> vector<2x8x1xf32>
    %53 = vector.broadcast %52 : vector<2x8x1xf32> to vector<2x8x8xf32>
    %54 = arith.mulf %49, %53 : vector<2x8x8xf32>
    "tpu.trace_start"() <{level = 10 : i32, message = "bqk,bkd->bqd"}> : () -> ()
    %cst_13 = arith.constant dense<0.000000e+00> : vector<2x8x8xf32>
    %55 = tpu.matmul %54, %43, %cst_13 {dimension_numbers = #tpu.dot_dimension_numbers<[2], [1], [1], [2], [0, 0, 0, 1, 1, 2], [0], [0]>} : vector<2x8x8xf32>, vector<2x8x8xf32>, vector<2x8x8xf32> -> vector<2x8x8xf32>
    "tpu.trace_stop"() : () -> ()
    %56 = vector.shape_cast %55 : vector<2x8x8xf32> to vector<16x8xf32>
    %c0_14 = arith.constant 0 : index
    %c0_15 = arith.constant 0 : index
    %57 = vector.load %arg2[%c0_14, %c0_15] : memref<32x32xf32, #tpu.memory_space<vmem>>, vector<8x32xf32>
    %cst_16 = arith.constant dense<0.000000e+00> : vector<16x32xf32>
    %58 = tpu.matmul %56, %57, %cst_16 {dimension_numbers = #tpu.dot_dimension_numbers<[1], [0], [0], [1], [0, 0, 1, 1], [], []>} : vector<16x8xf32>, vector<8x32xf32>, vector<16x32xf32> -> vector<16x32xf32>
    %59 = vector.extract_strided_slice %37 {offsets = [0, 8], sizes = [16, 8], strides = [1, 1]} : vector<16x96xf32> to vector<16x8xf32>
    %60 = vector.shape_cast %59 : vector<16x8xf32> to vector<2x8x8xf32>
    %61 = vector.extract_strided_slice %37 {offsets = [0, 40], sizes = [16, 8], strides = [1, 1]} : vector<16x96xf32> to vector<16x8xf32>
    %62 = vector.shape_cast %61 : vector<16x8xf32> to vector<2x8x8xf32>
    %63 = vector.extract_strided_slice %37 {offsets = [0, 72], sizes = [16, 8], strides = [1, 1]} : vector<16x96xf32> to vector<16x8xf32>
    %64 = vector.shape_cast %63 : vector<16x8xf32> to vector<2x8x8xf32>
    "tpu.trace_start"() <{level = 10 : i32, message = "bqd,bkd->bqk"}> : () -> ()
    %cst_17 = arith.constant dense<0.000000e+00> : vector<2x8x8xf32>
    %65 = tpu.matmul %60, %62, %cst_17 {dimension_numbers = #tpu.dot_dimension_numbers<[2], [2], [1], [1], [0, 0, 0, 1, 1, 1], [0], [0]>} : vector<2x8x8xf32>, vector<2x8x8xf32>, vector<2x8x8xf32> -> vector<2x8x8xf32>
    "tpu.trace_stop"() : () -> ()
    %cst_18 = arith.constant dense<0xFF800000> : vector<2x8xf32>
    %66 = vector.multi_reduction <maximumf>, %65, %cst_18 [2] : vector<2x8x8xf32> to vector<2x8xf32>
    %67 = vector.shape_cast %66 : vector<2x8xf32> to vector<2x8x1xf32>
    %68 = vector.broadcast %67 : vector<2x8x1xf32> to vector<2x8x8xf32>
    %69 = arith.subf %65, %68 : vector<2x8x8xf32>
    %70 = math.exp %69 : vector<2x8x8xf32>
    %cst_19 = arith.constant dense<0.000000e+00> : vector<2x8xf32>
    %71 = vector.multi_reduction <add>, %70, %cst_19 [2] : vector<2x8x8xf32> to vector<2x8xf32>
    %72 = vector.shape_cast %71 : vector<2x8xf32> to vector<2x8x1xf32>
    %73 = tpu.reciprocal %72 {approx = true} : vector<2x8x1xf32> -> vector<2x8x1xf32>
    %74 = vector.broadcast %73 : vector<2x8x1xf32> to vector<2x8x8xf32>
    %75 = arith.mulf %70, %74 : vector<2x8x8xf32>
    "tpu.trace_start"() <{level = 10 : i32, message = "bqk,bkd->bqd"}> : () -> ()
    %cst_20 = arith.constant dense<0.000000e+00> : vector<2x8x8xf32>
    %76 = tpu.matmul %75, %64, %cst_20 {dimension_numbers = #tpu.dot_dimension_numbers<[2], [1], [1], [2], [0, 0, 0, 1, 1, 2], [0], [0]>} : vector<2x8x8xf32>, vector<2x8x8xf32>, vector<2x8x8xf32> -> vector<2x8x8xf32>
    "tpu.trace_stop"() : () -> ()
    %77 = vector.shape_cast %76 : vector<2x8x8xf32> to vector<16x8xf32>
    %c8 = arith.constant 8 : index
    %c0_21 = arith.constant 0 : index
    %78 = vector.load %arg2[%c8, %c0_21] : memref<32x32xf32, #tpu.memory_space<vmem>>, vector<8x32xf32>
    %cst_22 = arith.constant dense<0.000000e+00> : vector<16x32xf32>
    %79 = tpu.matmul %77, %78, %cst_22 {dimension_numbers = #tpu.dot_dimension_numbers<[1], [0], [0], [1], [0, 0, 1, 1], [], []>} : vector<16x8xf32>, vector<8x32xf32>, vector<16x32xf32> -> vector<16x32xf32>
    %80 = arith.addf %58, %79 : vector<16x32xf32>
    %81 = vector.extract_strided_slice %37 {offsets = [0, 16], sizes = [16, 8], strides = [1, 1]} : vector<16x96xf32> to vector<16x8xf32>
    %82 = vector.shape_cast %81 : vector<16x8xf32> to vector<2x8x8xf32>
    %83 = vector.extract_strided_slice %37 {offsets = [0, 48], sizes = [16, 8], strides = [1, 1]} : vector<16x96xf32> to vector<16x8xf32>
    %84 = vector.shape_cast %83 : vector<16x8xf32> to vector<2x8x8xf32>
    %85 = vector.extract_strided_slice %37 {offsets = [0, 80], sizes = [16, 8], strides = [1, 1]} : vector<16x96xf32> to vector<16x8xf32>
    %86 = vector.shape_cast %85 : vector<16x8xf32> to vector<2x8x8xf32>
    "tpu.trace_start"() <{level = 10 : i32, message = "bqd,bkd->bqk"}> : () -> ()
    %cst_23 = arith.constant dense<0.000000e+00> : vector<2x8x8xf32>
    %87 = tpu.matmul %82, %84, %cst_23 {dimension_numbers = #tpu.dot_dimension_numbers<[2], [2], [1], [1], [0, 0, 0, 1, 1, 1], [0], [0]>} : vector<2x8x8xf32>, vector<2x8x8xf32>, vector<2x8x8xf32> -> vector<2x8x8xf32>
    "tpu.trace_stop"() : () -> ()
    %cst_24 = arith.constant dense<0xFF800000> : vector<2x8xf32>
    %88 = vector.multi_reduction <maximumf>, %87, %cst_24 [2] : vector<2x8x8xf32> to vector<2x8xf32>
    %89 = vector.shape_cast %88 : vector<2x8xf32> to vector<2x8x1xf32>
    %90 = vector.broadcast %89 : vector<2x8x1xf32> to vector<2x8x8xf32>
    %91 = arith.subf %87, %90 : vector<2x8x8xf32>
    %92 = math.exp %91 : vector<2x8x8xf32>
    %cst_25 = arith.constant dense<0.000000e+00> : vector<2x8xf32>
    %93 = vector.multi_reduction <add>, %92, %cst_25 [2] : vector<2x8x8xf32> to vector<2x8xf32>
    %94 = vector.shape_cast %93 : vector<2x8xf32> to vector<2x8x1xf32>
    %95 = tpu.reciprocal %94 {approx = true} : vector<2x8x1xf32> -> vector<2x8x1xf32>
    %96 = vector.broadcast %95 : vector<2x8x1xf32> to vector<2x8x8xf32>
    %97 = arith.mulf %92, %96 : vector<2x8x8xf32>
    "tpu.trace_start"() <{level = 10 : i32, message = "bqk,bkd->bqd"}> : () -> ()
    %cst_26 = arith.constant dense<0.000000e+00> : vector<2x8x8xf32>
    %98 = tpu.matmul %97, %86, %cst_26 {dimension_numbers = #tpu.dot_dimension_numbers<[2], [1], [1], [2], [0, 0, 0, 1, 1, 2], [0], [0]>} : vector<2x8x8xf32>, vector<2x8x8xf32>, vector<2x8x8xf32> -> vector<2x8x8xf32>
    "tpu.trace_stop"() : () -> ()
    %99 = vector.shape_cast %98 : vector<2x8x8xf32> to vector<16x8xf32>
    %c16 = arith.constant 16 : index
    %c0_27 = arith.constant 0 : index
    %100 = vector.load %arg2[%c16, %c0_27] : memref<32x32xf32, #tpu.memory_space<vmem>>, vector<8x32xf32>
    %cst_28 = arith.constant dense<0.000000e+00> : vector<16x32xf32>
    %101 = tpu.matmul %99, %100, %cst_28 {dimension_numbers = #tpu.dot_dimension_numbers<[1], [0], [0], [1], [0, 0, 1, 1], [], []>} : vector<16x8xf32>, vector<8x32xf32>, vector<16x32xf32> -> vector<16x32xf32>
    %102 = arith.addf %80, %101 : vector<16x32xf32>
    %103 = vector.extract_strided_slice %37 {offsets = [0, 24], sizes = [16, 8], strides = [1, 1]} : vector<16x96xf32> to vector<16x8xf32>
    %104 = vector.shape_cast %103 : vector<16x8xf32> to vector<2x8x8xf32>
    %105 = vector.extract_strided_slice %37 {offsets = [0, 56], sizes = [16, 8], strides = [1, 1]} : vector<16x96xf32> to vector<16x8xf32>
    %106 = vector.shape_cast %105 : vector<16x8xf32> to vector<2x8x8xf32>
    %107 = vector.extract_strided_slice %37 {offsets = [0, 88], sizes = [16, 8], strides = [1, 1]} : vector<16x96xf32> to vector<16x8xf32>
    %108 = vector.shape_cast %107 : vector<16x8xf32> to vector<2x8x8xf32>
    "tpu.trace_start"() <{level = 10 : i32, message = "bqd,bkd->bqk"}> : () -> ()
    %cst_29 = arith.constant dense<0.000000e+00> : vector<2x8x8xf32>
    %109 = tpu.matmul %104, %106, %cst_29 {dimension_numbers = #tpu.dot_dimension_numbers<[2], [2], [1], [1], [0, 0, 0, 1, 1, 1], [0], [0]>} : vector<2x8x8xf32>, vector<2x8x8xf32>, vector<2x8x8xf32> -> vector<2x8x8xf32>
    "tpu.trace_stop"() : () -> ()
    %cst_30 = arith.constant dense<0xFF800000> : vector<2x8xf32>
    %110 = vector.multi_reduction <maximumf>, %109, %cst_30 [2] : vector<2x8x8xf32> to vector<2x8xf32>
    %111 = vector.shape_cast %110 : vector<2x8xf32> to vector<2x8x1xf32>
    %112 = vector.broadcast %111 : vector<2x8x1xf32> to vector<2x8x8xf32>
    %113 = arith.subf %109, %112 : vector<2x8x8xf32>
    %114 = math.exp %113 : vector<2x8x8xf32>
    %cst_31 = arith.constant dense<0.000000e+00> : vector<2x8xf32>
    %115 = vector.multi_reduction <add>, %114, %cst_31 [2] : vector<2x8x8xf32> to vector<2x8xf32>
    %116 = vector.shape_cast %115 : vector<2x8xf32> to vector<2x8x1xf32>
    %117 = tpu.reciprocal %116 {approx = true} : vector<2x8x1xf32> -> vector<2x8x1xf32>
    %118 = vector.broadcast %117 : vector<2x8x1xf32> to vector<2x8x8xf32>
    %119 = arith.mulf %114, %118 : vector<2x8x8xf32>
    "tpu.trace_start"() <{level = 10 : i32, message = "bqk,bkd->bqd"}> : () -> ()
    %cst_32 = arith.constant dense<0.000000e+00> : vector<2x8x8xf32>
    %120 = tpu.matmul %119, %108, %cst_32 {dimension_numbers = #tpu.dot_dimension_numbers<[2], [1], [1], [2], [0, 0, 0, 1, 1, 2], [0], [0]>} : vector<2x8x8xf32>, vector<2x8x8xf32>, vector<2x8x8xf32> -> vector<2x8x8xf32>
    "tpu.trace_stop"() : () -> ()
    %121 = vector.shape_cast %120 : vector<2x8x8xf32> to vector<16x8xf32>
    %c24 = arith.constant 24 : index
    %c0_33 = arith.constant 0 : index
    %122 = vector.load %arg2[%c24, %c0_33] : memref<32x32xf32, #tpu.memory_space<vmem>>, vector<8x32xf32>
    %cst_34 = arith.constant dense<0.000000e+00> : vector<16x32xf32>
    %123 = tpu.matmul %121, %122, %cst_34 {dimension_numbers = #tpu.dot_dimension_numbers<[1], [0], [0], [1], [0, 0, 1, 1], [], []>} : vector<16x8xf32>, vector<8x32xf32>, vector<16x32xf32> -> vector<16x32xf32>
    %124 = arith.addf %102, %123 : vector<16x32xf32>
    %125 = arith.addf %0, %124 : vector<16x32xf32>
    %126 = vector.broadcast %3 : vector<1x32xf32> to vector<16x32xf32>
    %127 = arith.addf %125, %126 : vector<16x32xf32>
    %cst_35 = arith.constant dense<0.000000e+00> : vector<16xf32>
    %128 = vector.multi_reduction <add>, %127, %cst_35 [1] : vector<16x32xf32> to vector<16xf32>
    %129 = vector.shape_cast %128 : vector<16xf32> to vector<16x1xf32>
    %cst_36 = arith.constant 3.200000e+01 : f32
    %130 = vector.broadcast %cst_36 : f32 to vector<16x1xf32>
    %131 = arith.divf %129, %130 : vector<16x1xf32>
    %132 = vector.broadcast %131 : vector<16x1xf32> to vector<16x32xf32>
    %133 = arith.subf %127, %132 : vector<16x32xf32>
    %134 = vector.broadcast %131 : vector<16x1xf32> to vector<16x32xf32>
    %135 = arith.subf %127, %134 : vector<16x32xf32>
    %136 = arith.mulf %133, %135 : vector<16x32xf32>
    %cst_37 = arith.constant dense<0.000000e+00> : vector<16xf32>
    %137 = vector.multi_reduction <add>, %136, %cst_37 [1] : vector<16x32xf32> to vector<16xf32>
    %138 = vector.shape_cast %137 : vector<16xf32> to vector<16x1xf32>
    %cst_38 = arith.constant 3.200000e+01 : f32
    %139 = vector.broadcast %cst_38 : f32 to vector<16x1xf32>
    %140 = arith.divf %138, %139 : vector<16x1xf32>
    %141 = vector.broadcast %131 : vector<16x1xf32> to vector<16x32xf32>
    %142 = arith.subf %127, %141 : vector<16x32xf32>
    %cst_39 = arith.constant 9.99999974E-6 : f32
    %143 = vector.broadcast %cst_39 : f32 to vector<16x1xf32>
    %144 = arith.addf %140, %143 : vector<16x1xf32>
    %145 = math.rsqrt %144 : vector<16x1xf32>
    %146 = vector.broadcast %145 : vector<16x1xf32> to vector<16x32xf32>
    %147 = arith.mulf %142, %146 : vector<16x32xf32>
    %148 = vector.broadcast %8 : vector<1x32xf32> to vector<16x32xf32>
    %149 = arith.mulf %147, %148 : vector<16x32xf32>
    %150 = vector.broadcast %9 : vector<1x32xf32> to vector<16x32xf32>
    %151 = arith.addf %149, %150 : vector<16x32xf32>
    %c0_40 = arith.constant 0 : index
    %c0_41 = arith.constant 0 : index
    %152 = vector.load %arg3[%c0_40, %c0_41] : memref<32x64xf32, #tpu.memory_space<vmem>>, vector<32x64xf32>
    %cst_42 = arith.constant dense<0.000000e+00> : vector<16x64xf32>
    %153 = tpu.matmul %151, %152, %cst_42 {dimension_numbers = #tpu.dot_dimension_numbers<[1], [0], [0], [1], [0, 0, 1, 1], [], []>} : vector<16x32xf32>, vector<32x64xf32>, vector<16x64xf32> -> vector<16x64xf32>
    %154 = vector.broadcast %4 : vector<1x64xf32> to vector<16x64xf32>
    %155 = arith.addf %153, %154 : vector<16x64xf32>
    %cst_43 = arith.constant 0.000000e+00 : f32
    %156 = vector.broadcast %cst_43 : f32 to vector<16x64xf32>
    %157 = arith.maximumf %155, %156 : vector<16x64xf32>
    %c0_44 = arith.constant 0 : index
    %c0_45 = arith.constant 0 : index
    %158 = vector.load %arg4[%c0_44, %c0_45] : memref<64x32xf32, #tpu.memory_space<vmem>>, vector<64x32xf32>
    %cst_46 = arith.constant dense<0.000000e+00> : vector<16x32xf32>
    %159 = tpu.matmul %157, %158, %cst_46 {dimension_numbers = #tpu.dot_dimension_numbers<[1], [0], [0], [1], [0, 0, 1, 1], [], []>} : vector<16x64xf32>, vector<64x32xf32>, vector<16x32xf32> -> vector<16x32xf32>
    %160 = vector.broadcast %5 : vector<1x32xf32> to vector<16x32xf32>
    %161 = arith.addf %159, %160 : vector<16x32xf32>
    %162 = arith.addf %127, %161 : vector<16x32xf32>
    %c0_47 = arith.constant 0 : index
    %c0_48 = arith.constant 0 : index
    %163 = vector.load %arg6[%c0_47, %c0_48] : memref<16x32xf32, #tpu.memory_space<vmem>>, vector<16x32xf32>
    tpu.vector_store %arg6[%c0_47, %c0_48], %162 {strides = array<i32>} : memref<16x32xf32, #tpu.memory_space<vmem>>, vector<16x32xf32>,
    return
  }
}

</mosaic_0001>

<llo_original>
// kernel: encoder_layer.1
$region0: #{encoder_layer.1}
  #allocation0 [shape = 'u32[]', space=smem, size = 0x4, offset = 0x4, fixed_abs, tag = 'smem constant byte address 0x4 - core index']
  #allocation1 [shape = 'u32[72,128]{1,0:T(1,128)}', space=vmem, size = 0x9000, scoped, tag = 'internal scratch']
  %s0 = inlined_call_operand.vmem [shape: f32[16,32], index: 0, kind: input, shape index: {}]
  %s1 = inlined_call_operand.vmem [shape: f32[32,96], index: 1, kind: input, shape index: {}]
  %s2 = inlined_call_operand.vmem [shape: f32[32,32], index: 2, kind: input, shape index: {}]
  %s3 = inlined_call_operand.vmem [shape: f32[32,64], index: 3, kind: input, shape index: {}]
  %s4 = inlined_call_operand.vmem [shape: f32[64,32], index: 4, kind: input, shape index: {}]
  %s5 = inlined_call_operand.vmem [shape: f32[8,128], index: 5, kind: input, shape index: {}]
  %s6 = inlined_call_operand.hbm [shape: f32[16,32], index: 6, kind: output, shape index: {}]
  %s7 = sld [smem:[#allocation0]]
  $region34: #{encoder_layer.1} parent=0
    _
  %s9 = ssub.s32 1, %s7
  %s10 = scalar_select 0, %s9, %s7
  $region1: #{encoder_layer.1} parent=0
    #allocation2 [shape = 'u8[8192]{0}', space=vmem, size = 0x2000, scoped, tag = 'output window, operand 0, single buffered']
    #allocation3 [shape = 's32[1]{0}', space=sflag, size = 0x4, scoped, tag = 'scoped memory for encoder_layer.1']
    %11 = vsyncpa [#allocation3], 0
    // Predicated region
    $region2: #{encoder_layer.1} parent=1 // pred_check
      _
    $region3: #{encoder_layer.1} parent=1 // pred_check_branch
      %13 = sbr.rel (0) target = $region5
    $region4: #{encoder_layer.1} parent=1 // pred_region
      _
    $region5: #{encoder_layer.1} parent=1 // pred_fallthru
      _
    // Predicated region
    $region6: #{encoder_layer.1} parent=1 // pred_check
      _
    $region7: #{encoder_layer.1} parent=1 // pred_check_branch
      %15 = sbr.rel (0) target = $region9
    $region8: #{encoder_layer.1} parent=1 // pred_region
      _
    $region9: #{encoder_layer.1} parent=1 // pred_fallthru
      _
    // Predicated region
    $region10: #{encoder_layer.1} parent=1 // pred_check
      _
    $region11: #{encoder_layer.1} parent=1 // pred_check_branch
      %17 = sbr.rel (0) target = $region13
    $region12: #{encoder_layer.1} parent=1 // pred_region
      _
    $region13: #{encoder_layer.1} parent=1 // pred_fallthru
      _
    // Predicated region
    $region14: #{encoder_layer.1} parent=1 // pred_check
      _
    $region15: #{encoder_layer.1} parent=1 // pred_check_branch
      %19 = sbr.rel (0) target = $region17
    $region16: #{encoder_layer.1} parent=1 // pred_region
      _
    $region17: #{encoder_layer.1} parent=1 // pred_fallthru
      _
    // Predicated region
    $region18: #{encoder_layer.1} parent=1 // pred_check
      _
    $region19: #{encoder_layer.1} parent=1 // pred_check_branch
      %21 = sbr.rel (0) target = $region21
    $region20: #{encoder_layer.1} parent=1 // pred_region
      _
    $region21: #{encoder_layer.1} parent=1 // pred_fallthru
      _
    // Predicated region
    $region22: #{encoder_layer.1} parent=1 // pred_check
      _
    $region23: #{encoder_layer.1} parent=1 // pred_check_branch
      %23 = sbr.rel (0) target = $region25
    $region24: #{encoder_layer.1} parent=1 // pred_region
      _
    $region25: #{encoder_layer.1} parent=1 // pred_fallthru
      _
    %v24 = vld [vmem:[%s0] sm:$0xff]
    %v25 = vld [vmem:[%s0 + $0x8] sm:$0xff]
    %v26 = vld [vmem:[%s5] sm:$0xff]
    %vm27 = vcmask 261120
    %v28 = vsel %vm27, %v24, 0.0
    %29 = vadd.xlane.f32.xlu0 %v28
    %v30 = vpop.xlane.xlu0 %29
    %v31 = vsel %vm27, %v25, 0.0
    %32 = vadd.xlane.f32.xlu0 %v31
    %v33 = vpop.xlane.xlu0 %32
    %v34 = vrcp.pop 32.0
    %v35 = vmul.f32 32.0, %v34
    %v36 = vsub.f32 1.0, %v35
    %v37 = vmul.f32 %v34, %v36
    %v38 = vadd.f32 %v34, %v37
    %vm39 = vweird.f32 %v34
    %v40 = vsel %vm39, %v34, %v38
    %v41 = vmul.f32 %v30, %v40
    %v42 = vmul.f32 %v33, %v40
    %v43 = vsub.f32 %v24, %v41
    %v44 = vsub.f32 %v25, %v42
    %v45 = vmul.f32 %v43, %v43
    %v46 = vmul.f32 %v44, %v44
    %v47 = vsel %vm27, %v45, 0.0
    %48 = vadd.xlane.f32.xlu0 %v47
    %v49 = vpop.xlane.xlu0 %48
    %v50 = vsel %vm27, %v46, 0.0
    %51 = vadd.xlane.f32.xlu0 %v50
    %v52 = vpop.xlane.xlu0 %51
    %v53 = vmul.f32 %v49, %v40
    %v54 = vmul.f32 %v52, %v40
    %v55 = vadd.f32 %v53, 1e-05
    %v56 = vadd.f32 %v54, 1e-05
    %v57 = vrsqrt.pop %v55
    %v58 = vmul.f32 %v57, %v55
    %v59 = vmul.f32 %v58, %v57
    %v60 = vmul.f32 0.5, %v59
    %v61 = vsub.f32 1.5, %v60
    %v62 = vmul.f32 %v57, %v61
    %vm63 = vweird.f32 %v55
    %vm64 = vweird.f32 %v57
    %vm65 = vmor %vm63, %vm64
    %v66 = vsel %vm65, %v57, %v62
    %v67 = vrsqrt.pop %v56
    %v68 = vmul.f32 %v67, %v56
    %v69 = vmul.f32 %v68, %v67
    %v70 = vmul.f32 0.5, %v69
    %v71 = vsub.f32 1.5, %v70
    %v72 = vmul.f32 %v67, %v71
    %vm73 = vweird.f32 %v56
    %vm74 = vweird.f32 %v67
    %vm75 = vmor %vm73, %vm74
    %v76 = vsel %vm75, %v67, %v72
    %v77 = vmul.f32 %v43, %v66
    %v78 = vmul.f32 %v44, %v76
    %v79 = vperm.slane %v26, 4
    %v80 = vmul.f32 %v77, %v79
    %v81 = vmul.f32 %v78, %v79
    %v82 = vperm.slane %v26, 5
    %v83 = vadd.f32 %v80, %v82
    %v84 = vadd.f32 %v81, %v82
    %v85 = vld [vmem:[%s1] sm:$0xff]
    %v86 = vld [vmem:[%s1 + $0x8] sm:$0xff]
    %v87 = vld [vmem:[%s1 + $0x10] sm:$0xff]
    %v88 = vld [vmem:[%s1 + $0x18] sm:$0xff]
    %v89 = vperm.slane %v26, 0
    %v91 = vsel %vm27, %v83, 0
    %v94 = vsel %vm27, %v84, 0
    %96 = vmatpush.msra.mxu0 0.0
    %97 = vmatpush.msra.mxu0 0.0
    %98 = vmatpush.msra.mxu0 0.0
    %99 = vmatpush.msra.mxu0 0.0
    %100 = vmatpush.msra.mxu0 0.0
    %101 = vmatpush.msra.mxu0 0.0
    %102 = vmatpush.msra.mxu0 0.0
    %103 = vmatpush.msra.mxu0 0.0
    %104 = vmatpush.msra.mxu0 0.0
    %105 = vmatpush.msra.mxu0 0.0
    %106 = vmatpush.msra.mxu0 0.0
    %107 = vmatpush.msra.mxu0 0.0
    %108 = vmatpush.msra.mxu0 %v88
    %109 = vmatpush.msra.mxu0 %v87
    %110 = vmatpush.msra.mxu0 %v86
    %111 = vmatpush.msra.mxu0 %v85
    %112 = vmatmul.f32.gmra.mxu0 %v91
    %v113 = vpop.f32.mrf.mxu0
    %v114 = vadd.f32 %v89, %v113
    %115 = vmatmul.f32.gmra.mxu0 %v94
    %v116 = vpop.f32.mrf.mxu0
    %v117 = vadd.f32 %v89, %v116
    %118 = vdwg.mxu0
    %120 = vrot.lane.b32.xlu0 %v114, 96
    %v121 = vpop.permute.xlu0 %120
    %vm122 = vcmask 64512
    %v123 = vsel %vm122, %v114, 0
    %v125 = vsel %vm122, %v121, 0
    %127 = vmatpush.xpose.msra.mxu0 0.0
    %128 = vmatpush.xpose.msra.mxu0 0.0
    %129 = vmatpush.xpose.msra.mxu0 0.0
    %130 = vmatpush.xpose.msra.mxu0 0.0
    %131 = vmatpush.xpose.msra.mxu0 0.0
    %132 = vmatpush.xpose.msra.mxu0 0.0
    %133 = vmatpush.xpose.msra.mxu0 0.0
    %134 = vmatpush.xpose.msra.mxu0 0.0
    %135 = vmatpush.xpose.msra.mxu0 0.0
    %136 = vmatpush.xpose.msra.mxu0 0.0
    %137 = vmatpush.xpose.msra.mxu0 0.0
    %138 = vmatpush.xpose.msra.mxu0 0.0
    %139 = vmatpush.xpose.msra.mxu0 0.0
    %140 = vmatpush.xpose.msra.mxu0 0.0
    %141 = vmatpush.xpose.msra.mxu0 0.0
    %142 = vmatpush.xpose.msra.mxu0 %v125
    %143 = vmatmul.f32.gmra.mxu0 %v123
    %v144 = vpop.f32.mrf.mxu0
    %v145 = vadd.f32 0.0, %v144
    %146 = vdwg.mxu0
    %148 = vrot.lane.b32.xlu0 %v117, 96
    %v149 = vpop.permute.xlu0 %148
    %v150 = vsel %vm122, %v117, 0
    %v152 = vsel %vm122, %v149, 0
    %154 = vmatpush.xpose.msra.mxu0 0.0
    %155 = vmatpush.xpose.msra.mxu0 0.0
    %156 = vmatpush.xpose.msra.mxu0 0.0
    %157 = vmatpush.xpose.msra.mxu0 0.0
    %158 = vmatpush.xpose.msra.mxu0 0.0
    %159 = vmatpush.xpose.msra.mxu0 0.0
    %160 = vmatpush.xpose.msra.mxu0 0.0
    %161 = vmatpush.xpose.msra.mxu0 0.0
    %162 = vmatpush.xpose.msra.mxu0 0.0
    %163 = vmatpush.xpose.msra.mxu0 0.0
    %164 = vmatpush.xpose.msra.mxu0 0.0
    %165 = vmatpush.xpose.msra.mxu0 0.0
    %166 = vmatpush.xpose.msra.mxu0 0.0
    %167 = vmatpush.xpose.msra.mxu0 0.0
    %168 = vmatpush.xpose.msra.mxu0 0.0
    %169 = vmatpush.xpose.msra.mxu0 %v152
    %170 = vmatmul.f32.gmra.mxu0 %v150
    %v171 = vpop.f32.mrf.mxu0
    %v172 = vadd.f32 0.0, %v171
    %173 = vdwg.mxu0
    %v174 = vsel %vm122, %v145, -inf
    %175 = vmax.xlane.f32.xlu0 %v174
    %v176 = vpop.xlane.xlu0 %175
    %v177 = vsel %vm122, %v172, -inf
    %178 = vmax.xlane.f32.xlu0 %v177
    %v179 = vpop.xlane.xlu0 %178
    %v180 = vsub.f32 %v145, %v176
    %v181 = vsub.f32 %v172, %v179
    %v182 = vmul.f32 %v180, 1.442695
    %v183 = vpow.pop %v182
    %v184 = vmul.f32 %v181, 1.442695
    %v185 = vpow.pop %v184
    %v186 = vsel %vm122, %v183, 0.0
    %187 = vadd.xlane.f32.xlu0 %v186
    %v188 = vpop.xlane.xlu0 %187
    %v189 = vsel %vm122, %v185, 0.0
    %190 = vadd.xlane.f32.xlu0 %v189
    %v191 = vpop.xlane.xlu0 %190
    %v192 = vrcp.pop %v188
    %v193 = vrcp.pop %v191
    %v194 = vmul.f32 %v183, %v192
    %v195 = vmul.f32 %v185, %v193
    %196 = vrot.lane.b32.xlu0 %v114, 64
    %v197 = vpop.permute.xlu0 %196
    %v200 = vsel %vm122, %v194, 0
    %202 = vmatpush.msra.mxu0 0.0
    %203 = vmatpush.msra.mxu0 0.0
    %204 = vmatpush.msra.mxu0 0.0
    %205 = vmatpush.msra.mxu0 0.0
    %206 = vmatpush.msra.mxu0 0.0
    %207 = vmatpush.msra.mxu0 0.0
    %208 = vmatpush.msra.mxu0 0.0
    %209 = vmatpush.msra.mxu0 0.0
    %210 = vmatpush.msra.mxu0 0.0
    %211 = vmatpush.msra.mxu0 0.0
    %212 = vmatpush.msra.mxu0 0.0
    %213 = vmatpush.msra.mxu0 0.0
    %214 = vmatpush.msra.mxu0 0.0
    %215 = vmatpush.msra.mxu0 0.0
    %216 = vmatpush.msra.mxu0 0.0
    %217 = vmatpush.msra.mxu0 %v197
    %218 = vmatmul.f32.gmra.mxu0 %v200
    %v219 = vpop.f32.mrf.mxu0
    %v220 = vadd.f32 0.0, %v219
    %221 = vdwg.mxu0
    %222 = vrot.lane.b32.xlu0 %v117, 64
    %v223 = vpop.permute.xlu0 %222
    %v226 = vsel %vm122, %v195, 0
    %228 = vmatpush.msra.mxu0 0.0
    %229 = vmatpush.msra.mxu0 0.0
    %230 = vmatpush.msra.mxu0 0.0
    %231 = vmatpush.msra.mxu0 0.0
    %232 = vmatpush.msra.mxu0 0.0
    %233 = vmatpush.msra.mxu0 0.0
    %234 = vmatpush.msra.mxu0 0.0
    %235 = vmatpush.msra.mxu0 0.0
    %236 = vmatpush.msra.mxu0 0.0
    %237 = vmatpush.msra.mxu0 0.0
    %238 = vmatpush.msra.mxu0 0.0
    %239 = vmatpush.msra.mxu0 0.0
    %240 = vmatpush.msra.mxu0 0.0
    %241 = vmatpush.msra.mxu0 0.0
    %242 = vmatpush.msra.mxu0 0.0
    %243 = vmatpush.msra.mxu0 %v223
    %244 = vmatmul.f32.gmra.mxu0 %v226
    %v245 = vpop.f32.mrf.mxu0
    %v246 = vadd.f32 0.0, %v245
    %247 = vdwg.mxu0
    %v248 = vld [vmem:[%s2] sm:$0xff]
    %249 = vrot.lane.b32.xlu0 %v114, 120
    %v250 = vpop.permute.xlu0 %249
    %251 = vrot.lane.b32.xlu0 %v114, 88
    %v252 = vpop.permute.xlu0 %251
    %v253 = vsel %vm122, %v250, 0
    %v255 = vsel %vm122, %v252, 0
    %257 = vmatpush.xpose.msra.mxu0 0.0
    %258 = vmatpush.xpose.msra.mxu0 0.0
    %259 = vmatpush.xpose.msra.mxu0 0.0
    %260 = vmatpush.xpose.msra.mxu0 0.0
    %261 = vmatpush.xpose.msra.mxu0 0.0
    %262 = vmatpush.xpose.msra.mxu0 0.0
    %263 = vmatpush.xpose.msra.mxu0 0.0
    %264 = vmatpush.xpose.msra.mxu0 0.0
    %265 = vmatpush.xpose.msra.mxu0 0.0
    %266 = vmatpush.xpose.msra.mxu0 0.0
    %267 = vmatpush.xpose.msra.mxu0 0.0
    %268 = vmatpush.xpose.msra.mxu0 0.0
    %269 = vmatpush.xpose.msra.mxu0 0.0
    %270 = vmatpush.xpose.msra.mxu0 0.0
    %271 = vmatpush.xpose.msra.mxu0 0.0
    %272 = vmatpush.xpose.msra.mxu0 %v255
    %273 = vmatmul.f32.gmra.mxu0 %v253
    %v274 = vpop.f32.mrf.mxu0
    %v275 = vadd.f32 0.0, %v274
    %276 = vdwg.mxu0
    %277 = vrot.lane.b32.xlu0 %v117, 120
    %v278 = vpop.permute.xlu0 %277
    %279 = vrot.lane.b32.xlu0 %v117, 88
    %v280 = vpop.permute.xlu0 %279
    %v281 = vsel %vm122, %v278, 0
    %v283 = vsel %vm122, %v280, 0
    %285 = vmatpush.xpose.msra.mxu0 0.0
    %286 = vmatpush.xpose.msra.mxu0 0.0
    %287 = vmatpush.xpose.msra.mxu0 0.0
    %288 = vmatpush.xpose.msra.mxu0 0.0
    %289 = vmatpush.xpose.msra.mxu0 0.0
    %290 = vmatpush.xpose.msra.mxu0 0.0
    %291 = vmatpush.xpose.msra.mxu0 0.0
    %292 = vmatpush.xpose.msra.mxu0 0.0
    %293 = vmatpush.xpose.msra.mxu0 0.0
    %294 = vmatpush.xpose.msra.mxu0 0.0
    %295 = vmatpush.xpose.msra.mxu0 0.0
    %296 = vmatpush.xpose.msra.mxu0 0.0
    %297 = vmatpush.xpose.msra.mxu0 0.0
    %298 = vmatpush.xpose.msra.mxu0 0.0
    %299 = vmatpush.xpose.msra.mxu0 0.0
    %300 = vmatpush.xpose.msra.mxu0 %v283
    %301 = vmatmul.f32.gmra.mxu0 %v281
    %v302 = vpop.f32.mrf.mxu0
    %v303 = vadd.f32 0.0, %v302
    %304 = vdwg.mxu0
    %v305 = vsel %vm122, %v275, -inf
    %306 = vmax.xlane.f32.xlu0 %v305
    %v307 = vpop.xlane.xlu0 %306
    %v308 = vsel %vm122, %v303, -inf
    %309 = vmax.xlane.f32.xlu0 %v308
    %v310 = vpop.xlane.xlu0 %309
    %v311 = vsub.f32 %v275, %v307
    %v312 = vsub.f32 %v303, %v310
    %v313 = vmul.f32 %v311, 1.442695
    %v314 = vpow.pop %v313
    %v315 = vmul.f32 %v312, 1.442695
    %v316 = vpow.pop %v315
    %v317 = vsel %vm122, %v314, 0.0
    %318 = vadd.xlane.f32.xlu0 %v317
    %v319 = vpop.xlane.xlu0 %318
    %v320 = vsel %vm122, %v316, 0.0
    %321 = vadd.xlane.f32.xlu0 %v320
    %v322 = vpop.xlane.xlu0 %321
    %v323 = vrcp.pop %v319
    %v324 = vrcp.pop %v322
    %v325 = vmul.f32 %v314, %v323
    %v326 = vmul.f32 %v316, %v324
    %327 = vrot.lane.b32.xlu0 %v114, 56
    %v328 = vpop.permute.xlu0 %327
    %v331 = vsel %vm122, %v325, 0
    %333 = vmatpush.msra.mxu0 0.0
    %334 = vmatpush.msra.mxu0 0.0
    %335 = vmatpush.msra.mxu0 0.0
    %336 = vmatpush.msra.mxu0 0.0
    %337 = vmatpush.msra.mxu0 0.0
    %338 = vmatpush.msra.mxu0 0.0
    %339 = vmatpush.msra.mxu0 0.0
    %340 = vmatpush.msra.mxu0 0.0
    %341 = vmatpush.msra.mxu0 0.0
    %342 = vmatpush.msra.mxu0 0.0
    %343 = vmatpush.msra.mxu0 0.0
    %344 = vmatpush.msra.mxu0 0.0
    %345 = vmatpush.msra.mxu0 0.0
    %346 = vmatpush.msra.mxu0 0.0
    %347 = vmatpush.msra.mxu0 0.0
    %348 = vmatpush.msra.mxu0 %v328
    %349 = vmatmul.f32.gmra.mxu0 %v331
    %v350 = vpop.f32.mrf.mxu0
    %v351 = vadd.f32 0.0, %v350
    %352 = vdwg.mxu0
    %353 = vrot.lane.b32.xlu0 %v117, 56
    %v354 = vpop.permute.xlu0 %353
    %v357 = vsel %vm122, %v326, 0
    %359 = vmatpush.msra.mxu0 0.0
    %360 = vmatpush.msra.mxu0 0.0
    %361 = vmatpush.msra.mxu0 0.0
    %362 = vmatpush.msra.mxu0 0.0
    %363 = vmatpush.msra.mxu0 0.0
    %364 = vmatpush.msra.mxu0 0.0
    %365 = vmatpush.msra.mxu0 0.0
    %366 = vmatpush.msra.mxu0 0.0
    %367 = vmatpush.msra.mxu0 0.0
    %368 = vmatpush.msra.mxu0 0.0
    %369 = vmatpush.msra.mxu0 0.0
    %370 = vmatpush.msra.mxu0 0.0
    %371 = vmatpush.msra.mxu0 0.0
    %372 = vmatpush.msra.mxu0 0.0
    %373 = vmatpush.msra.mxu0 0.0
    %374 = vmatpush.msra.mxu0 %v354
    %375 = vmatmul.f32.gmra.mxu0 %v357
    %v376 = vpop.f32.mrf.mxu0
    %v377 = vadd.f32 0.0, %v376
    %378 = vdwg.mxu0
    %v379 = vld [vmem:[%s2 + $0x8] sm:$0xff]
    %v381 = vsel %vm122, %v351, 0
    %v384 = vsel %vm122, %v377, 0
    %386 = vmatpush.msra.mxu0 0.0
    %387 = vmatpush.msra.mxu0 0.0
    %388 = vmatpush.msra.mxu0 0.0
    %389 = vmatpush.msra.mxu0 0.0
    %390 = vmatpush.msra.mxu0 0.0
    %391 = vmatpush.msra.mxu0 0.0
    %392 = vmatpush.msra.mxu0 0.0
    %393 = vmatpush.msra.mxu0 0.0
    %394 = vmatpush.msra.mxu0 0.0
    %395 = vmatpush.msra.mxu0 0.0
    %396 = vmatpush.msra.mxu0 0.0
    %397 = vmatpush.msra.mxu0 0.0
    %398 = vmatpush.msra.mxu0 0.0
    %399 = vmatpush.msra.mxu0 0.0
    %400 = vmatpush.msra.mxu0 0.0
    %401 = vmatpush.msra.mxu0 %v379
    %402 = vmatmul.f32.gmra.mxu0 %v381
    %v403 = vpop.f32.mrf.mxu0
    %v404 = vadd.f32 0.0, %v403
    %405 = vmatmul.f32.gmra.mxu0 %v384
    %v406 = vpop.f32.mrf.mxu0
    %v407 = vadd.f32 0.0, %v406
    %408 = vdwg.mxu0
    %v410 = vsel %vm122, %v220, 0
    %v413 = vsel %vm122, %v246, 0
    %415 = vmatpush.msra.mxu0 0.0
    %416 = vmatpush.msra.mxu0 0.0
    %417 = vmatpush.msra.mxu0 0.0
    %418 = vmatpush.msra.mxu0 0.0
    %419 = vmatpush.msra.mxu0 0.0
    %420 = vmatpush.msra.mxu0 0.0
    %421 = vmatpush.msra.mxu0 0.0
    %422 = vmatpush.msra.mxu0 0.0
    %423 = vmatpush.msra.mxu0 0.0
    %424 = vmatpush.msra.mxu0 0.0
    %425 = vmatpush.msra.mxu0 0.0
    %426 = vmatpush.msra.mxu0 0.0
    %427 = vmatpush.msra.mxu0 0.0
    %428 = vmatpush.msra.mxu0 0.0
    %429 = vmatpush.msra.mxu0 0.0
    %430 = vmatpush.msra.mxu0 %v248
    %431 = vmatmul.f32.gmra.mxu0 %v410
    %v432 = vpop.f32.mrf.mxu0
    %v433 = vadd.f32 %v404, %v432
    %434 = vmatmul.f32.gmra.mxu0 %v413
    %v435 = vpop.f32.mrf.mxu0
    %v436 = vadd.f32 %v407, %v435
    %437 = vdwg.mxu0
    %438 = vrot.lane.b32.xlu0 %v114, 112
    %v439 = vpop.permute.xlu0 %438
    %440 = vrot.lane.b32.xlu0 %v114, 80
    %v441 = vpop.permute.xlu0 %440
    %v442 = vsel %vm122, %v439, 0
    %v444 = vsel %vm122, %v441, 0
    %446 = vmatpush.xpose.msra.mxu0 0.0
    %447 = vmatpush.xpose.msra.mxu0 0.0
    %448 = vmatpush.xpose.msra.mxu0 0.0
    %449 = vmatpush.xpose.msra.mxu0 0.0
    %450 = vmatpush.xpose.msra.mxu0 0.0
    %451 = vmatpush.xpose.msra.mxu0 0.0
    %452 = vmatpush.xpose.msra.mxu0 0.0
    %453 = vmatpush.xpose.msra.mxu0 0.0
    %454 = vmatpush.xpose.msra.mxu0 0.0
    %455 = vmatpush.xpose.msra.mxu0 0.0
    %456 = vmatpush.xpose.msra.mxu0 0.0
    %457 = vmatpush.xpose.msra.mxu0 0.0
    %458 = vmatpush.xpose.msra.mxu0 0.0
    %459 = vmatpush.xpose.msra.mxu0 0.0
    %460 = vmatpush.xpose.msra.mxu0 0.0
    %461 = vmatpush.xpose.msra.mxu0 %v444
    %462 = vmatmul.f32.gmra.mxu0 %v442
    %v463 = vpop.f32.mrf.mxu0
    %v464 = vadd.f32 0.0, %v463
    %465 = vdwg.mxu0
    %466 = vrot.lane.b32.xlu0 %v117, 112
    %v467 = vpop.permute.xlu0 %466
    %468 = vrot.lane.b32.xlu0 %v117, 80
    %v469 = vpop.permute.xlu0 %468
    %v470 = vsel %vm122, %v467, 0
    %v472 = vsel %vm122, %v469, 0
    %474 = vmatpush.xpose.msra.mxu0 0.0
    %475 = vmatpush.xpose.msra.mxu0 0.0
    %476 = vmatpush.xpose.msra.mxu0 0.0
    %477 = vmatpush.xpose.msra.mxu0 0.0
    %478 = vmatpush.xpose.msra.mxu0 0.0
    %479 = vmatpush.xpose.msra.mxu0 0.0
    %480 = vmatpush.xpose.msra.mxu0 0.0
    %481 = vmatpush.xpose.msra.mxu0 0.0
    %482 = vmatpush.xpose.msra.mxu0 0.0
    %483 = vmatpush.xpose.msra.mxu0 0.0
    %484 = vmatpush.xpose.msra.mxu0 0.0
    %485 = vmatpush.xpose.msra.mxu0 0.0
    %486 = vmatpush.xpose.msra.mxu0 0.0
    %487 = vmatpush.xpose.msra.mxu0 0.0
    %488 = vmatpush.xpose.msra.mxu0 0.0
    %489 = vmatpush.xpose.msra.mxu0 %v472
    %490 = vmatmul.f32.gmra.mxu0 %v470
    %v491 = vpop.f32.mrf.mxu0
    %v492 = vadd.f32 0.0, %v491
    %493 = vdwg.mxu0
    %v494 = vsel %vm122, %v464, -inf
    %495 = vmax.xlane.f32.xlu0 %v494
    %v496 = vpop.xlane.xlu0 %495
    %v497 = vsel %vm122, %v492, -inf
    %498 = vmax.xlane.f32.xlu0 %v497
    %v499 = vpop.xlane.xlu0 %498
    %v500 = vsub.f32 %v464, %v496
    %v501 = vsub.f32 %v492, %v499
    %v502 = vmul.f32 %v500, 1.442695
    %v503 = vpow.pop %v502
    %v504 = vmul.f32 %v501, 1.442695
    %v505 = vpow.pop %v504
    %v506 = vsel %vm122, %v503, 0.0
    %507 = vadd.xlane.f32.xlu0 %v506
    %v508 = vpop.xlane.xlu0 %507
    %v509 = vsel %vm122, %v505, 0.0
    %510 = vadd.xlane.f32.xlu0 %v509
    %v511 = vpop.xlane.xlu0 %510
    %v512 = vrcp.pop %v508
    %v513 = vrcp.pop %v511
    %v514 = vmul.f32 %v503, %v512
    %v515 = vmul.f32 %v505, %v513
    %516 = vrot.lane.b32.xlu0 %v114, 48
    %v517 = vpop.permute.xlu0 %516
    %v520 = vsel %vm122, %v514, 0
    %522 = vmatpush.msra.mxu0 0.0
    %523 = vmatpush.msra.mxu0 0.0
    %524 = vmatpush.msra.mxu0 0.0
    %525 = vmatpush.msra.mxu0 0.0
    %526 = vmatpush.msra.mxu0 0.0
    %527 = vmatpush.msra.mxu0 0.0
    %528 = vmatpush.msra.mxu0 0.0
    %529 = vmatpush.msra.mxu0 0.0
    %530 = vmatpush.msra.mxu0 0.0
    %531 = vmatpush.msra.mxu0 0.0
    %532 = vmatpush.msra.mxu0 0.0
    %533 = vmatpush.msra.mxu0 0.0
    %534 = vmatpush.msra.mxu0 0.0
    %535 = vmatpush.msra.mxu0 0.0
    %536 = vmatpush.msra.mxu0 0.0
    %537 = vmatpush.msra.mxu0 %v517
    %538 = vmatmul.f32.gmra.mxu0 %v520
    %v539 = vpop.f32.mrf.mxu0
    %v540 = vadd.f32 0.0, %v539
    %541 = vdwg.mxu0
    %542 = vrot.lane.b32.xlu0 %v117, 48
    %v543 = vpop.permute.xlu0 %542
    %v546 = vsel %vm122, %v515, 0
    %548 = vmatpush.msra.mxu0 0.0
    %549 = vmatpush.msra.mxu0 0.0
    %550 = vmatpush.msra.mxu0 0.0
    %551 = vmatpush.msra.mxu0 0.0
    %552 = vmatpush.msra.mxu0 0.0
    %553 = vmatpush.msra.mxu0 0.0
    %554 = vmatpush.msra.mxu0 0.0
    %555 = vmatpush.msra.mxu0 0.0
    %556 = vmatpush.msra.mxu0 0.0
    %557 = vmatpush.msra.mxu0 0.0
    %558 = vmatpush.msra.mxu0 0.0
    %559 = vmatpush.msra.mxu0 0.0
    %560 = vmatpush.msra.mxu0 0.0
    %561 = vmatpush.msra.mxu0 0.0
    %562 = vmatpush.msra.mxu0 0.0
    %563 = vmatpush.msra.mxu0 %v543
    %564 = vmatmul.f32.gmra.mxu0 %v546
    %v565 = vpop.f32.mrf.mxu0
    %v566 = vadd.f32 0.0, %v565
    %567 = vdwg.mxu0
    %v568 = vld [vmem:[%s2 + $0x10] sm:$0xff]
    %v570 = vsel %vm122, %v540, 0
    %v573 = vsel %vm122, %v566, 0
    %575 = vmatpush.msra.mxu0 0.0
    %576 = vmatpush.msra.mxu0 0.0
    %577 = vmatpush.msra.mxu0 0.0
    %578 = vmatpush.msra.mxu0 0.0
    %579 = vmatpush.msra.mxu0 0.0
    %580 = vmatpush.msra.mxu0 0.0
    %581 = vmatpush.msra.mxu0 0.0
    %582 = vmatpush.msra.mxu0 0.0
    %583 = vmatpush.msra.mxu0 0.0
    %584 = vmatpush.msra.mxu0 0.0
    %585 = vmatpush.msra.mxu0 0.0
    %586 = vmatpush.msra.mxu0 0.0
    %587 = vmatpush.msra.mxu0 0.0
    %588 = vmatpush.msra.mxu0 0.0
    %589 = vmatpush.msra.mxu0 0.0
    %590 = vmatpush.msra.mxu0 %v568
    %591 = vmatmul.f32.gmra.mxu0 %v570
    %v592 = vpop.f32.mrf.mxu0
    %v593 = vadd.f32 0.0, %v592
    %594 = vmatmul.f32.gmra.mxu0 %v573
    %v595 = vpop.f32.mrf.mxu0
    %v596 = vadd.f32 0.0, %v595
    %597 = vdwg.mxu0
    %v598 = vadd.f32 %v433, %v593
    %v599 = vadd.f32 %v436, %v596
    %600 = vrot.lane.b32.xlu0 %v114, 104
    %v601 = vpop.permute.xlu0 %600
    %602 = vrot.lane.b32.xlu0 %v114, 72
    %v603 = vpop.permute.xlu0 %602
    %v604 = vsel %vm122, %v601, 0
    %v606 = vsel %vm122, %v603, 0
    %608 = vmatpush.xpose.msra.mxu0 0.0
    %609 = vmatpush.xpose.msra.mxu0 0.0
    %610 = vmatpush.xpose.msra.mxu0 0.0
    %611 = vmatpush.xpose.msra.mxu0 0.0
    %612 = vmatpush.xpose.msra.mxu0 0.0
    %613 = vmatpush.xpose.msra.mxu0 0.0
    %614 = vmatpush.xpose.msra.mxu0 0.0
    %615 = vmatpush.xpose.msra.mxu0 0.0
    %616 = vmatpush.xpose.msra.mxu0 0.0
    %617 = vmatpush.xpose.msra.mxu0 0.0
    %618 = vmatpush.xpose.msra.mxu0 0.0
    %619 = vmatpush.xpose.msra.mxu0 0.0
    %620 = vmatpush.xpose.msra.mxu0 0.0
    %621 = vmatpush.xpose.msra.mxu0 0.0
    %622 = vmatpush.xpose.msra.mxu0 0.0
    %623 = vmatpush.xpose.msra.mxu0 %v606
    %624 = vmatmul.f32.gmra.mxu0 %v604
    %v625 = vpop.f32.mrf.mxu0
    %v626 = vadd.f32 0.0, %v625
    %627 = vdwg.mxu0
    %628 = vrot.lane.b32.xlu0 %v117, 104
    %v629 = vpop.permute.xlu0 %628
    %630 = vrot.lane.b32.xlu0 %v117, 72
    %v631 = vpop.permute.xlu0 %630
    %v632 = vsel %vm122, %v629, 0
    %v634 = vsel %vm122, %v631, 0
    %636 = vmatpush.xpose.msra.mxu0 0.0
    %637 = vmatpush.xpose.msra.mxu0 0.0
    %638 = vmatpush.xpose.msra.mxu0 0.0
    %639 = vmatpush.xpose.msra.mxu0 0.0
    %640 = vmatpush.xpose.msra.mxu0 0.0
    %641 = vmatpush.xpose.msra.mxu0 0.0
    %642 = vmatpush.xpose.msra.mxu0 0.0
    %643 = vmatpush.xpose.msra.mxu0 0.0
    %644 = vmatpush.xpose.msra.mxu0 0.0
    %645 = vmatpush.xpose.msra.mxu0 0.0
    %646 = vmatpush.xpose.msra.mxu0 0.0
    %647 = vmatpush.xpose.msra.mxu0 0.0
    %648 = vmatpush.xpose.msra.mxu0 0.0
    %649 = vmatpush.xpose.msra.mxu0 0.0
    %650 = vmatpush.xpose.msra.mxu0 0.0
    %651 = vmatpush.xpose.msra.mxu0 %v634
    %652 = vmatmul.f32.gmra.mxu0 %v632
    %v653 = vpop.f32.mrf.mxu0
    %v654 = vadd.f32 0.0, %v653
    %655 = vdwg.mxu0
    %v656 = vsel %vm122, %v626, -inf
    %657 = vmax.xlane.f32.xlu0 %v656
    %v658 = vpop.xlane.xlu0 %657
    %v659 = vsel %vm122, %v654, -inf
    %660 = vmax.xlane.f32.xlu0 %v659
    %v661 = vpop.xlane.xlu0 %660
    %v662 = vsub.f32 %v626, %v658
    %v663 = vsub.f32 %v654, %v661
    %v664 = vmul.f32 %v662, 1.442695
    %v665 = vpow.pop %v664
    %v666 = vmul.f32 %v663, 1.442695
    %v667 = vpow.pop %v666
    %v668 = vsel %vm122, %v665, 0.0
    %669 = vadd.xlane.f32.xlu0 %v668
    %v670 = vpop.xlane.xlu0 %669
    %v671 = vsel %vm122, %v667, 0.0
    %672 = vadd.xlane.f32.xlu0 %v671
    %v673 = vpop.xlane.xlu0 %672
    %v674 = vrcp.pop %v670
    %v675 = vrcp.pop %v673
    %v676 = vmul.f32 %v665, %v674
    %v677 = vmul.f32 %v667, %v675
    %678 = vrot.lane.b32.xlu0 %v114, 40
    %v679 = vpop.permute.xlu0 %678
    %v682 = vsel %vm122, %v676, 0
    %684 = vmatpush.msra.mxu0 0.0
    %685 = vmatpush.msra.mxu0 0.0
    %686 = vmatpush.msra.mxu0 0.0
    %687 = vmatpush.msra.mxu0 0.0
    %688 = vmatpush.msra.mxu0 0.0
    %689 = vmatpush.msra.mxu0 0.0
    %690 = vmatpush.msra.mxu0 0.0
    %691 = vmatpush.msra.mxu0 0.0
    %692 = vmatpush.msra.mxu0 0.0
    %693 = vmatpush.msra.mxu0 0.0
    %694 = vmatpush.msra.mxu0 0.0
    %695 = vmatpush.msra.mxu0 0.0
    %696 = vmatpush.msra.mxu0 0.0
    %697 = vmatpush.msra.mxu0 0.0
    %698 = vmatpush.msra.mxu0 0.0
    %699 = vmatpush.msra.mxu0 %v679
    %700 = vmatmul.f32.gmra.mxu0 %v682
    %v701 = vpop.f32.mrf.mxu0
    %v702 = vadd.f32 0.0, %v701
    %703 = vdwg.mxu0
    %704 = vrot.lane.b32.xlu0 %v117, 40
    %v705 = vpop.permute.xlu0 %704
    %v708 = vsel %vm122, %v677, 0
    %710 = vmatpush.msra.mxu0 0.0
    %711 = vmatpush.msra.mxu0 0.0
    %712 = vmatpush.msra.mxu0 0.0
    %713 = vmatpush.msra.mxu0 0.0
    %714 = vmatpush.msra.mxu0 0.0
    %715 = vmatpush.msra.mxu0 0.0
    %716 = vmatpush.msra.mxu0 0.0
    %717 = vmatpush.msra.mxu0 0.0
    %718 = vmatpush.msra.mxu0 0.0
    %719 = vmatpush.msra.mxu0 0.0
    %720 = vmatpush.msra.mxu0 0.0
    %721 = vmatpush.msra.mxu0 0.0
    %722 = vmatpush.msra.mxu0 0.0
    %723 = vmatpush.msra.mxu0 0.0
    %724 = vmatpush.msra.mxu0 0.0
    %725 = vmatpush.msra.mxu0 %v705
    %726 = vmatmul.f32.gmra.mxu0 %v708
    %v727 = vpop.f32.mrf.mxu0
    %v728 = vadd.f32 0.0, %v727
    %729 = vdwg.mxu0
    %v730 = vld [vmem:[%s2 + $0x18] sm:$0xff]
    %v732 = vsel %vm122, %v702, 0
    %v735 = vsel %vm122, %v728, 0
    %737 = vmatpush.msra.mxu0 0.0
    %738 = vmatpush.msra.mxu0 0.0
    %739 = vmatpush.msra.mxu0 0.0
    %740 = vmatpush.msra.mxu0 0.0
    %741 = vmatpush.msra.mxu0 0.0
    %742 = vmatpush.msra.mxu0 0.0
    %743 = vmatpush.msra.mxu0 0.0
    %744 = vmatpush.msra.mxu0 0.0
    %745 = vmatpush.msra.mxu0 0.0
    %746 = vmatpush.msra.mxu0 0.0
    %747 = vmatpush.msra.mxu0 0.0
    %748 = vmatpush.msra.mxu0 0.0
    %749 = vmatpush.msra.mxu0 0.0
    %750 = vmatpush.msra.mxu0 0.0
    %751 = vmatpush.msra.mxu0 0.0
    %752 = vmatpush.msra.mxu0 %v730
    %753 = vmatmul.f32.gmra.mxu0 %v732
    %v754 = vpop.f32.mrf.mxu0
    %v755 = vadd.f32 0.0, %v754
    %756 = vmatmul.f32.gmra.mxu0 %v735
    %v757 = vpop.f32.mrf.mxu0
    %v758 = vadd.f32 0.0, %v757
    %759 = vdwg.mxu0
    %v760 = vadd.f32 %v598, %v755
    %v761 = vadd.f32 %v599, %v758
    %v762 = vadd.f32 %v24, %v760
    %v763 = vadd.f32 %v25, %v761
    %v764 = vperm.slane %v26, 1
    %v765 = vadd.f32 %v762, %v764
    %v766 = vadd.f32 %v763, %v764
    %v767 = vsel %vm27, %v765, 0.0
    %768 = vadd.xlane.f32.xlu0 %v767
    %v769 = vpop.xlane.xlu0 %768
    %v770 = vsel %vm27, %v766, 0.0
    %771 = vadd.xlane.f32.xlu0 %v770
    %v772 = vpop.xlane.xlu0 %771
    %v773 = vmul.f32 %v769, %v40
    %v774 = vmul.f32 %v772, %v40
    %v775 = vsub.f32 %v765, %v773
    %v776 = vsub.f32 %v766, %v774
    %v777 = vmul.f32 %v775, %v775
    %v778 = vmul.f32 %v776, %v776
    %v779 = vsel %vm27, %v777, 0.0
    %780 = vadd.xlane.f32.xlu0 %v779
    %v781 = vpop.xlane.xlu0 %780
    %v782 = vsel %vm27, %v778, 0.0
    %783 = vadd.xlane.f32.xlu0 %v782
    %v784 = vpop.xlane.xlu0 %783
    %v785 = vmul.f32 %v781, %v40
    %v786 = vmul.f32 %v784, %v40
    %v787 = vadd.f32 %v785, 1e-05
    %v788 = vadd.f32 %v786, 1e-05
    %v789 = vrsqrt.pop %v787
    %v790 = vmul.f32 %v789, %v787
    %v791 = vmul.f32 %v790, %v789
    %v792 = vmul.f32 0.5, %v791
    %v793 = vsub.f32 1.5, %v792
    %v794 = vmul.f32 %v789, %v793
    %vm795 = vweird.f32 %v787
    %vm796 = vweird.f32 %v789
    %vm797 = vmor %vm795, %vm796
    %v798 = vsel %vm797, %v789, %v794
    %v799 = vrsqrt.pop %v788
    %v800 = vmul.f32 %v799, %v788
    %v801 = vmul.f32 %v800, %v799
    %v802 = vmul.f32 0.5, %v801
    %v803 = vsub.f32 1.5, %v802
    %v804 = vmul.f32 %v799, %v803
    %vm805 = vweird.f32 %v788
    %vm806 = vweird.f32 %v799
    %vm807 = vmor %vm805, %vm806
    %v808 = vsel %vm807, %v799, %v804
    %v809 = vmul.f32 %v775, %v798
    %v810 = vmul.f32 %v776, %v808
    %v811 = vperm.slane %v26, 6
    %v812 = vmul.f32 %v809, %v811
    %v813 = vmul.f32 %v810, %v811
    %v814 = vperm.slane %v26, 7
    %v815 = vadd.f32 %v812, %v814
    %v816 = vadd.f32 %v813, %v814
    %v817 = vld [vmem:[%s3] sm:$0xff]
    %v818 = vld [vmem:[%s3 + $0x8] sm:$0xff]
    %v819 = vld [vmem:[%s3 + $0x10] sm:$0xff]
    %v820 = vld [vmem:[%s3 + $0x18] sm:$0xff]
    %v821 = vperm.slane %v26, 2
    %v823 = vsel %vm27, %v815, 0
    %v826 = vsel %vm27, %v816, 0
    %828 = vmatpush.msra.mxu0 0.0
    %829 = vmatpush.msra.mxu0 0.0
    %830 = vmatpush.msra.mxu0 0.0
    %831 = vmatpush.msra.mxu0 0.0
    %832 = vmatpush.msra.mxu0 0.0
    %833 = vmatpush.msra.mxu0 0.0
    %834 = vmatpush.msra.mxu0 0.0
    %835 = vmatpush.msra.mxu0 0.0
    %836 = vmatpush.msra.mxu0 0.0
    %837 = vmatpush.msra.mxu0 0.0
    %838 = vmatpush.msra.mxu0 0.0
    %839 = vmatpush.msra.mxu0 0.0
    %840 = vmatpush.msra.mxu0 %v820
    %841 = vmatpush.msra.mxu0 %v819
    %842 = vmatpush.msra.mxu0 %v818
    %843 = vmatpush.msra.mxu0 %v817
    %844 = vmatmul.f32.gmra.mxu0 %v823
    %v845 = vpop.f32.mrf.mxu0
    %v846 = vadd.f32 %v821, %v845
    %847 = vmatmul.f32.gmra.mxu0 %v826
    %v848 = vpop.f32.mrf.mxu0
    %v849 = vadd.f32 %v821, %v848
    %850 = vdwg.mxu0
    %v851 = vmax.f32 %v846, 0.0
    %v852 = vmax.f32 %v849, 0.0
    %v853 = vld [vmem:[%s4] sm:$0xff]
    %v854 = vld [vmem:[%s4 + $0x8] sm:$0xff]
    %v855 = vld [vmem:[%s4 + $0x10] sm:$0xff]
    %v856 = vld [vmem:[%s4 + $0x18] sm:$0xff]
    %v857 = vld [vmem:[%s4 + $0x20] sm:$0xff]
    %v858 = vld [vmem:[%s4 + $0x28] sm:$0xff]
    %v859 = vld [vmem:[%s4 + $0x30] sm:$0xff]
    %v860 = vld [vmem:[%s4 + $0x38] sm:$0xff]
    %v861 = vperm.slane %v26, 3
    %vm862 = vcmask 523264
    %v864 = vsel %vm862, %v851, 0
    %v867 = vsel %vm862, %v852, 0
    %869 = vmatpush.msra.mxu0 0.0
    %870 = vmatpush.msra.mxu0 0.0
    %871 = vmatpush.msra.mxu0 0.0
    %872 = vmatpush.msra.mxu0 0.0
    %873 = vmatpush.msra.mxu0 0.0
    %874 = vmatpush.msra.mxu0 0.0
    %875 = vmatpush.msra.mxu0 0.0
    %876 = vmatpush.msra.mxu0 0.0
    %877 = vmatpush.msra.mxu0 %v860
    %878 = vmatpush.msra.mxu0 %v859
    %879 = vmatpush.msra.mxu0 %v858
    %880 = vmatpush.msra.mxu0 %v857
    %881 = vmatpush.msra.mxu0 %v856
    %882 = vmatpush.msra.mxu0 %v855
    %883 = vmatpush.msra.mxu0 %v854
    %884 = vmatpush.msra.mxu0 %v853
    %885 = vmatmul.f32.gmra.mxu0 %v864
    %v886 = vpop.f32.mrf.mxu0
    %v887 = vadd.f32 %v861, %v886
    %888 = vmatmul.f32.gmra.mxu0 %v867
    %v889 = vpop.f32.mrf.mxu0
    %v890 = vadd.f32 %v861, %v889
    %891 = vdwg.mxu0
    %v892 = vadd.f32 %v765, %v887
    %v893 = vadd.f32 %v766, %v890
    %894 = vst.msk [vmem:[#allocation2] sm:$0xff] %vm27, %v892
    %895 = vst.msk [vmem:[#allocation2 + $0x8] sm:$0xff] %vm27, %v893
    // Predicated region
    $region26: #{encoder_layer.1} parent=1 // pred_check
      _
    $region27: #{encoder_layer.1} parent=1 // pred_check_branch
      %897 = sbr.rel (0) target = $region29
    $region28: #{encoder_layer.1} parent=1 // pred_region
      %899 = vsyncadd [#allocation3], 0
      %s900 = sshll.u32 [#allocation2], 4
      %s901 = int_to_ptr.vmem [resolvable:$true] %s900
      %s902 = sshll.u32 %s6, 4
      %s903 = int_to_ptr.hbm [resolvable:$true] %s902
      %908 = dma.vmem_to_hbm [thread:$0]  %s901, 256, %s903, [#allocation3], 128, 128, 8
    $region29: #{encoder_layer.1} parent=1 // pred_fallthru
      _
    // Predicated region
    $region30: #{encoder_layer.1} parent=1 // pred_check
      _
    $region31: #{encoder_layer.1} parent=1 // pred_check_branch
      %910 = sbr.rel (0) target = $region33
    $region32: #{encoder_layer.1} parent=1 // pred_region
      %912 = dma.done [#allocation3], 256
    $region33: #{encoder_layer.1} parent=1 // pred_fallthru
      _
    %913 = vsyncpa [#allocation3], 1

</llo_original>
